<compile_context>
chip_gen: v7x
topology: tpu7x:2x2x1
jax: 0.10.0
libtpu: 0.0.40
codegen_flags: <defaults>
</compile_context>

<pallas_src>
import jax
import jax.numpy as jnp
from jax import lax
from jax.experimental import pallas as pl
from jax.experimental.pallas import tpu as pltpu


def _round_up(x, m):
    return ((x + m - 1) // m) * m


def _vmem_config():
    """(vmem_limit_bytes, tile_budget_bytes) — larger on 128-MiB-VMEM chips."""
    try:
        kind = jax.devices()[0].device_kind.lower()
    except Exception:
        kind = ""
    if any(tag in kind for tag in ("v4", "v5", "v6")):
        return 96 * 1024 * 1024, 64 * 1024 * 1024
    # v7x (64 MiB physical VMEM) / unknown backend / interpret: stay conservative.
    return 32 * 1024 * 1024, 24 * 1024 * 1024


def _choose_batch_tile(batch, feat_dim, c_pad, budget_bytes):
    """Pick the batch tile by bytes, not a fixed row cap."""
    row_bytes = feat_dim * 4
    # Per-row VMEM estimate: feat double-buffer, label block (lane-padded tile),
    # one-hot, gathered-centers / diff intermediates.
    per_row = 2 * row_bytes + 2 * 512 + c_pad * 4 + 2 * row_bytes
    centers_bytes = 2 * c_pad * row_bytes            # resident centers (2 bufs)
    avail = max(budget_bytes - centers_bytes, 1 << 20)
    tb = max(8, min(avail // per_row, 4096))
    tb = (tb // 8) * 8
    return min(tb, _round_up(batch, 8))


def _make_loss_kernel(batch, tb, c_pad, tiles_per_par):
    def loss_kernel(feat_ref, labcol_ref, centers_ref, partial_ref, count_ref):
        p = pl.program_id(0)
        t = pl.program_id(1)

        @pl.when(t == 0)
        def _():
            partial_ref[...] = jnp.zeros_like(partial_ref)
            count_ref[...] = jnp.zeros_like(count_ref)

        # One-hot over classes doubles as (a) an MXU row-gather of centers and
        # (b) the per-class histogram contribution. Padded / out-of-range batch
        # rows get an all-zero one-hot row, so they contribute nothing.
        lab = labcol_ref[...]                                          # (tb, 1) int32
        row = (p * tiles_per_par + t) * tb + lax.broadcasted_iota(
            jnp.int32, (tb, 1), 0)
        valid = row < batch
        cls = lax.broadcasted_iota(jnp.int32, (tb, c_pad), 1)
        onehot = ((cls == lab) & valid).astype(jnp.float32)            # (tb, c_pad)

        # Gather: scent[i] = centers[label[i]] with one MXU matmul (no loop).
        scent = jnp.dot(onehot, centers_ref[...],
                        preferred_element_type=jnp.float32)            # (tb, D)
        diff = feat_ref[...] - scent
        sq = jnp.sum(diff * diff, axis=1, keepdims=True)               # (tb, 1)
        sq = jnp.where(valid, sq, 0.0)                                 # mask ragged tail
        r = jnp.sqrt(sq)                                               # (tb, 1)

        # Per-class partial sums into lane-dense resident accumulators.
        psum = jnp.sum(onehot * r, axis=0, keepdims=True)              # (1, c_pad)
        csum = jnp.sum(onehot, axis=0, keepdims=True)                  # (1, c_pad)
        partial_ref[...] += psum.reshape(1, 1, c_pad)
        count_ref[...] += csum.reshape(1, 1, c_pad)

    return loss_kernel


def center_loss_pallas(feat, centers, label):
    """feat: (B, D) f32, centers: (C, D) f32, label: (B,) int -> scalar f32."""
    feat = jnp.asarray(feat, jnp.float32)
    centers = jnp.asarray(centers, jnp.float32)
    label = jnp.asarray(label, jnp.int32)

    batch, feat_dim = feat.shape
    cls_dim = centers.shape[0]
    c_pad = _round_up(cls_dim, 128)               # lane-dense class dim

    vmem_limit, tile_budget = _vmem_config()
    tb = _choose_batch_tile(batch, feat_dim, c_pad, tile_budget)

    total_tiles = pl.cdiv(batch, tb)
    num_par = 2 if total_tiles >= 2 else 1        # feed both v7x TensorCores
    tiles_per_par = pl.cdiv(total_tiles, num_par)
    b_pad = num_par * tiles_per_par * tb

    # feat is the only large operand: skip the padding copy when aligned.
    if b_pad == batch:
        feat_p = feat
    else:
        feat_p = jnp.zeros((b_pad, feat_dim), jnp.float32).at[:batch].set(feat)

    labels_p = jnp.zeros((b_pad,), jnp.int32).at[:batch].set(label)
    labcol = labels_p.reshape(b_pad, 1)

    if c_pad == cls_dim:
        centers_p = centers
    else:
        centers_p = jnp.zeros((c_pad, feat_dim), jnp.float32).at[:cls_dim].set(centers)

    cost = pl.CostEstimate(
        flops=int(2 * b_pad * c_pad * feat_dim + 6 * b_pad * feat_dim
                  + 4 * b_pad * c_pad),
        transcendentals=int(b_pad),
        bytes_accessed=int(4 * (b_pad * feat_dim + b_pad + c_pad * feat_dim
                                + 2 * num_par * c_pad)),
    )

    partial_out, count_out = pl.pallas_call(
        _make_loss_kernel(batch, tb, c_pad, tiles_per_par),
        grid=(num_par, tiles_per_par),
        in_specs=[
            pl.BlockSpec((tb, feat_dim), lambda p, t: (p * tiles_per_par + t, 0)),
            pl.BlockSpec((tb, 1), lambda p, t: (p * tiles_per_par + t, 0)),
            pl.BlockSpec((c_pad, feat_dim), lambda p, t: (0, 0)),   # resident centers
        ],
        out_specs=(
            pl.BlockSpec((1, 1, c_pad), lambda p, t: (p, 0, 0)),    # per-slice partials
            pl.BlockSpec((1, 1, c_pad), lambda p, t: (p, 0, 0)),    # per-slice counts
        ),
        out_shape=(
            jax.ShapeDtypeStruct((num_par, 1, c_pad), jnp.float32),
            jax.ShapeDtypeStruct((num_par, 1, c_pad), jnp.float32),
        ),
        compiler_params=pltpu.CompilerParams(
            dimension_semantics=("parallel", "arbitrary"),
            vmem_limit_bytes=vmem_limit,
        ),
        cost_estimate=cost,
    )(feat_p, labcol, centers_p)

    # Tiny C-length finalize in the wrapper (classes with count 0 have
    # partial 0; clamp avoids 0 * inf).
    partial = jnp.sum(partial_out.reshape(num_par, c_pad), axis=0)
    count = jnp.sum(count_out.reshape(num_par, c_pad), axis=0)
    loss = jnp.sum(partial * lax.rsqrt(jnp.maximum(count, 1.0))) / batch
    return loss


def center_loss_ref(feat, centers, label):
    """Plain-JAX reference mirroring the PyTorch forward."""
    scent = centers[label]
    hist = jnp.zeros((centers.shape[0],), jnp.float32).at[label].add(1.0)
    count = hist[label]
    per = jnp.sqrt(jnp.sum((feat - scent) ** 2, axis=1) / count)
    return jnp.sum(per) / label.shape[0]


if __name__ == "__main__":
    cls_dim, feat_dim, batch = 16, 32, 8

    key = jax.random.PRNGKey(0)
    k_cent, k_feat, k_lab = jax.random.split(key, 3)

    # Deterministic "parameter" init (stands in for nn.Parameter(torch.randn(...))).
    centers = jax.random.normal(k_cent, (cls_dim, feat_dim), dtype=jnp.float32)
    feat = jax.random.normal(k_feat, (batch, feat_dim), dtype=jnp.float32)
    label = jax.random.randint(k_lab, (batch,), 0, cls_dim, dtype=jnp.int32)

    loss = jax.block_until_ready(center_loss_pallas(feat, centers, label))
    loss_ref = jax.block_until_ready(center_loss_ref(feat, centers, label))

    assert jnp.allclose(loss, loss_ref, rtol=1e-5, atol=1e-5), (loss, loss_ref)
    print("KERNEL_OK")
</pallas_src>

<mosaic_0001>
module attributes {stable_mosaic.version = 11 : i64} {
  func.func @loss_kernel(%arg0: i32, %arg1: i32, %arg2: memref<8x32xf32, #tpu.memory_space<vmem>>, %arg3: memref<8x1xi32, #tpu.memory_space<vmem>>, %arg4: memref<128x32xf32, #tpu.memory_space<vmem>>, %arg5: memref<1x1x128xf32, #tpu.memory_space<vmem>>, %arg6: memref<1x1x128xf32, #tpu.memory_space<vmem>>) attributes {dimension_semantics = [#tpu.dimension_semantics<parallel>, #tpu.dimension_semantics<arbitrary>], iteration_bounds = array<i64: 1, 1>, scalar_prefetch = 0 : i64, scratch_operands = 0 : i64, tpu.core_type = #tpu.core_type<tc>, window_params = [{transform_indices = @transform_0, window_bounds = array<i64: 8, 32>}, {transform_indices = @transform_1, window_bounds = array<i64: 8, 1>}, {pipeline_mode = #tpu.pipeline_mode<synchronous>, transform_indices = @transform_2, window_bounds = array<i64: 128, 32>}, {transform_indices = @transform_3, window_bounds = array<i64: 1, 1, 128>}, {transform_indices = @transform_4, window_bounds = array<i64: 1, 1, 128>}]} {
    %c0_i32 = arith.constant 0 : i32
    %0 = arith.cmpi eq, %arg1, %c0_i32 : i32
    %1 = arith.extui %0 : i1 to i32
    %c0_i32_0 = arith.constant 0 : i32
    %2 = arith.cmpi ne, %1, %c0_i32_0 : i32
    scf.if %2 {
      %cst_23 = arith.constant 0.000000e+00 : f32
      %43 = vector.broadcast %cst_23 : f32 to vector<1x1x128xf32>
      %c0_24 = arith.constant 0 : index
      %c0_25 = arith.constant 0 : index
      %c0_26 = arith.constant 0 : index
      %44 = vector.load %arg5[%c0_24, %c0_25, %c0_26] : memref<1x1x128xf32, #tpu.memory_space<vmem>>, vector<1x1x128xf32>
      tpu.vector_store %arg5[%c0_24, %c0_25, %c0_26], %43 {strides = array<i32>} : memref<1x1x128xf32, #tpu.memory_space<vmem>>, vector<1x1x128xf32>,
      %cst_27 = arith.constant 0.000000e+00 : f32
      %45 = vector.broadcast %cst_27 : f32 to vector<1x1x128xf32>
      %c0_28 = arith.constant 0 : index
      %c0_29 = arith.constant 0 : index
      %c0_30 = arith.constant 0 : index
      %46 = vector.load %arg6[%c0_28, %c0_29, %c0_30] : memref<1x1x128xf32, #tpu.memory_space<vmem>>, vector<1x1x128xf32>
      tpu.vector_store %arg6[%c0_28, %c0_29, %c0_30], %45 {strides = array<i32>} : memref<1x1x128xf32, #tpu.memory_space<vmem>>, vector<1x1x128xf32>,
    } else {
    }
    %c0 = arith.constant 0 : index
    %c0_1 = arith.constant 0 : index
    %3 = vector.load %arg3[%c0, %c0_1] : memref<8x1xi32, #tpu.memory_space<vmem>>, vector<8x1xi32>
    %c1_i32 = arith.constant 1 : i32
    %4 = arith.muli %arg0, %c1_i32 : i32
    %5 = arith.addi %4, %arg1 : i32
    %c8_i32 = arith.constant 8 : i32
    %6 = arith.muli %5, %c8_i32 : i32
    %7 = tpu.iota {dimensions = array<i32: 0>} : vector<8x1xi32>
    %8 = vector.broadcast %6 : i32 to vector<8x1xi32>
    %9 = arith.addi %8, %7 : vector<8x1xi32>
    %c8_i32_2 = arith.constant 8 : i32
    %10 = vector.broadcast %c8_i32_2 : i32 to vector<8x1xi32>
    %11 = arith.cmpi slt, %9, %10 : vector<8x1xi32>
    %12 = tpu.iota {dimensions = array<i32: 1>} : vector<8x128xi32>
    %13 = vector.broadcast %3 : vector<8x1xi32> to vector<8x128xi32>
    %14 = arith.cmpi eq, %12, %13 : vector<8x128xi32>
    %15 = vector.broadcast %11 : vector<8x1xi1> to vector<8x128xi1>
    %16 = arith.andi %14, %15 : vector<8x128xi1>
    %17 = arith.extui %16 : vector<8x128xi1> to vector<8x128xi32>
    %18 = arith.sitofp %17 : vector<8x128xi32> to vector<8x128xf32>
    %c0_3 = arith.constant 0 : index
    %c0_4 = arith.constant 0 : index
    %19 = vector.load %arg4[%c0_3, %c0_4] : memref<128x32xf32, #tpu.memory_space<vmem>>, vector<128x32xf32>
    %cst = arith.constant dense<0.000000e+00> : vector<8x32xf32>
    %20 = tpu.matmul %18, %19, %cst {dimension_numbers = #tpu.dot_dimension_numbers<[1], [0], [0], [1], [0, 0, 1, 1], [], []>} : vector<8x128xf32>, vector<128x32xf32>, vector<8x32xf32> -> vector<8x32xf32>
    %c0_5 = arith.constant 0 : index
    %c0_6 = arith.constant 0 : index
    %21 = vector.load %arg2[%c0_5, %c0_6] : memref<8x32xf32, #tpu.memory_space<vmem>>, vector<8x32xf32>
    %22 = arith.subf %21, %20 : vector<8x32xf32>
    %23 = arith.mulf %22, %22 : vector<8x32xf32>
    %cst_7 = arith.constant dense<0.000000e+00> : vector<8xf32>
    %24 = vector.multi_reduction <add>, %23, %cst_7 [1] : vector<8x32xf32> to vector<8xf32>
    %25 = vector.shape_cast %24 : vector<8xf32> to vector<8x1xf32>
    %cst_8 = arith.constant 0.000000e+00 : f32
    %26 = vector.broadcast %cst_8 : f32 to vector<8x1xf32>
    %27 = arith.select %11, %25, %26 : vector<8x1xi1>, vector<8x1xf32>
    %28 = math.sqrt %27 : vector<8x1xf32>
    %29 = vector.broadcast %28 : vector<8x1xf32> to vector<8x128xf32>
    %30 = arith.mulf %18, %29 : vector<8x128xf32>
    %cst_9 = arith.constant dense<0.000000e+00> : vector<128xf32>
    %31 = vector.multi_reduction <add>, %30, %cst_9 [0] : vector<8x128xf32> to vector<128xf32>
    %32 = vector.shape_cast %31 : vector<128xf32> to vector<1x128xf32>
    %cst_10 = arith.constant dense<0.000000e+00> : vector<128xf32>
    %33 = vector.multi_reduction <add>, %18, %cst_10 [0] : vector<8x128xf32> to vector<128xf32>
    %34 = vector.shape_cast %33 : vector<128xf32> to vector<1x128xf32>
    %c0_11 = arith.constant 0 : index
    %c0_12 = arith.constant 0 : index
    %c0_13 = arith.constant 0 : index
    %35 = vector.load %arg5[%c0_11, %c0_12, %c0_13] : memref<1x1x128xf32, #tpu.memory_space<vmem>>, vector<1x1x128xf32>
    %36 = vector.shape_cast %32 : vector<1x128xf32> to vector<1x1x128xf32>
    %37 = arith.addf %35, %36 : vector<1x1x128xf32>
    %c0_14 = arith.constant 0 : index
    %c0_15 = arith.constant 0 : index
    %c0_16 = arith.constant 0 : index
    %38 = vector.load %arg5[%c0_14, %c0_15, %c0_16] : memref<1x1x128xf32, #tpu.memory_space<vmem>>, vector<1x1x128xf32>
    tpu.vector_store %arg5[%c0_14, %c0_15, %c0_16], %37 {strides = array<i32>} : memref<1x1x128xf32, #tpu.memory_space<vmem>>, vector<1x1x128xf32>,
    %c0_17 = arith.constant 0 : index
    %c0_18 = arith.constant 0 : index
    %c0_19 = arith.constant 0 : index
    %39 = vector.load %arg6[%c0_17, %c0_18, %c0_19] : memref<1x1x128xf32, #tpu.memory_space<vmem>>, vector<1x1x128xf32>
    %40 = vector.shape_cast %34 : vector<1x128xf32> to vector<1x1x128xf32>
    %41 = arith.addf %39, %40 : vector<1x1x128xf32>
    %c0_20 = arith.constant 0 : index
    %c0_21 = arith.constant 0 : index
    %c0_22 = arith.constant 0 : index
    %42 = vector.load %arg6[%c0_20, %c0_21, %c0_22] : memref<1x1x128xf32, #tpu.memory_space<vmem>>, vector<1x1x128xf32>
    tpu.vector_store %arg6[%c0_20, %c0_21, %c0_22], %41 {strides = array<i32>} : memref<1x1x128xf32, #tpu.memory_space<vmem>>, vector<1x1x128xf32>,
    return
  }
  func.func @transform_0(%arg0: i32, %arg1: i32) -> (i32, i32) {
    %c1_i32 = arith.constant 1 : i32
    %0 = arith.muli %arg0, %c1_i32 : i32
    %1 = arith.addi %0, %arg1 : i32
    %c0_i32 = arith.constant 0 : i32
    %c0_i32_0 = arith.constant 0 : i32
    return %1, %c0_i32 : i32, i32
  }
  func.func @transform_1(%arg0: i32, %arg1: i32) -> (i32, i32) {
    %c1_i32 = arith.constant 1 : i32
    %0 = arith.muli %arg0, %c1_i32 : i32
    %1 = arith.addi %0, %arg1 : i32
    %c0_i32 = arith.constant 0 : i32
    %c0_i32_0 = arith.constant 0 : i32
    return %1, %c0_i32 : i32, i32
  }
  func.func @transform_2(%arg0: i32, %arg1: i32) -> (i32, i32) {
    %c0_i32 = arith.constant 0 : i32
    %c0_i32_0 = arith.constant 0 : i32
    %c0_i32_1 = arith.constant 0 : i32
    return %c0_i32, %c0_i32_0 : i32, i32
  }
  func.func @transform_3(%arg0: i32, %arg1: i32) -> (i32, i32, i32) {
    %c0_i32 = arith.constant 0 : i32
    %c0_i32_0 = arith.constant 0 : i32
    %c0_i32_1 = arith.constant 0 : i32
    return %arg0, %c0_i32, %c0_i32_0 : i32, i32, i32
  }
  func.func @transform_4(%arg0: i32, %arg1: i32) -> (i32, i32, i32) {
    %c0_i32 = arith.constant 0 : i32
    %c0_i32_0 = arith.constant 0 : i32
    %c0_i32_1 = arith.constant 0 : i32
    return %arg0, %c0_i32, %c0_i32_0 : i32, i32, i32
  }
}

</mosaic_0001>

<llo_original>
// kernel: tpu_custom_call.1
$region0: #{tpu_custom_call.1}
  #allocation0 [shape = 'u32[]', space=smem, size = 0x4, offset = 0x4, fixed_abs, tag = 'smem constant byte address 0x4 - core index']
  #allocation1 [shape = 'u32[144,128]{1,0:T(1,128)}', space=vmem, size = 0x12000, scoped, tag = 'internal scratch']
  %s0 = inlined_call_operand.vmem [shape: f32[8,32], index: 0, kind: input, shape index: {}]
  %s1 = inlined_call_operand.vmem [shape: s32[8,1], index: 1, kind: input, shape index: {}]
  %s2 = inlined_call_operand.vmem [shape: f32[128,32], index: 2, kind: input, shape index: {}]
  %s3 = inlined_call_operand.hbm [shape: f32[1,1,128], index: 3, kind: output, shape index: {0}]
  %s4 = inlined_call_operand.hbm [shape: f32[1,1,128], index: 4, kind: output, shape index: {1}]
  %5 = xla_tuple %s3, %s4
  %s6 = sld [smem:[#allocation0]]
  $region34: #{tpu_custom_call.1} parent=0
    _
  %s8 = ssub.s32 1, %s6
  %s9 = scalar_select 0, %s8, %s6
  $region1: #{tpu_custom_call.1} parent=0
    #allocation2 [shape = 'u8[512]{0}', space=vmem, size = 0x400, scoped, tag = 'output window, operand 0, single buffered']
    #allocation3 [shape = 's32[1]{0}', space=sflag, size = 0x4, scoped, tag = 'scoped memory for tpu_custom_call.1']
    #allocation4 [shape = 'u8[512]{0}', space=vmem, size = 0x400, scoped, tag = 'output window, operand 1, single buffered']
    #allocation5 [shape = 's32[1]{0}', space=sflag, size = 0x4, scoped, tag = 'scoped memory for tpu_custom_call.1']
    %10 = vsyncpa [#allocation3], 0
    %11 = vsyncpa [#allocation5], 0
    // Predicated region
    $region2: #{tpu_custom_call.1} parent=1 // pred_check
      _
    $region3: #{tpu_custom_call.1} parent=1 // pred_check_branch
      %13 = sbr.rel (0) target = $region5
    $region4: #{tpu_custom_call.1} parent=1 // pred_region
      %s14 = sadd.s32 0, 0
      %p15 = scmp.lt.s32.totalorder %s14, 0
      %s16 = scalar_select %p15, %s14, 0
      %s17 = smul.addr %s16, 8
      %s18 = scalar_lea.vmem %s0, %s17
      %s19 = sadd.s32 0, 0
    $region5: #{tpu_custom_call.1} parent=1 // pred_fallthru
      _
    // Predicated region
    $region6: #{tpu_custom_call.1} parent=1 // pred_check
      _
    $region7: #{tpu_custom_call.1} parent=1 // pred_check_branch
      %21 = sbr.rel (0) target = $region9
    $region8: #{tpu_custom_call.1} parent=1 // pred_region
      %s22 = sadd.s32 0, 0
      %p23 = scmp.lt.s32.totalorder %s22, 0
      %s24 = scalar_select %p23, %s22, 0
      %s25 = smul.addr %s24, 8
      %s26 = scalar_lea.vmem %s1, %s25
      %s27 = sadd.s32 0, 0
    $region9: #{tpu_custom_call.1} parent=1 // pred_fallthru
      _
    // Predicated region
    $region10: #{tpu_custom_call.1} parent=1 // pred_check
      _
    $region11: #{tpu_custom_call.1} parent=1 // pred_check_branch
      %29 = sbr.rel (0) target = $region13
    $region12: #{tpu_custom_call.1} parent=1 // pred_region
      _
    $region13: #{tpu_custom_call.1} parent=1 // pred_fallthru
      _
    %s30 = sadd.s32 0, 0
    %p31 = scmp.lt.s32.totalorder %s30, 0
    %s32 = scalar_select %p31, %s30, 0
    %s33 = smul.addr %s32, 8
    %s34 = scalar_lea.vmem %s0, %s33
    %s35 = sadd.s32 0, 0
    %p36 = scmp.lt.s32.totalorder %s35, 0
    %s37 = scalar_select %p36, %s35, 0
    %s38 = smul.addr %s37, 8
    %s39 = scalar_lea.vmem %s1, %s38
    %s40 = sadd.s32 0, 0
    %p41 = scmp.lt.s32.totalorder %s40, 0
    %s42 = scalar_select %p41, %s40, 0
    %s43 = smul.addr %s42, 8
    %s44 = scalar_lea.vmem %s0, %s43
    %s45 = sadd.s32 0, 0
    %s46 = sadd.s32 0, 0
    %p47 = scmp.lt.s32.totalorder %s46, 0
    %s48 = scalar_select %p47, %s46, 0
    %s49 = smul.addr %s48, 8
    %s50 = scalar_lea.vmem %s1, %s49
    %s51 = sadd.s32 0, 0
    %p52 = scmp.eq.s32.totalorder 0, 0
    // Predicated region
    $region14: #{tpu_custom_call.1} parent=1 // pred_check
      %p53 = pneg %p52
    $region15: #{tpu_custom_call.1} parent=1 // pred_check_branch
      %55 = sbr.rel (%p53) target = $region17
    $region16: #{tpu_custom_call.1} parent=1 // pred_region
      %56 = vst [vmem:[#allocation2] sm:$0x1] 0.0
      %57 = vst [vmem:[#allocation4] sm:$0x1] 0.0
    $region17: #{tpu_custom_call.1} parent=1 // pred_fallthru
      _
    %v58 = vld [vmem:[%s50] sm:$0xff]
    %s59 = sadd.s32 0, 0
    %s60 = smul.u32 %s59, 8
    %v61 = vlaneseq
    %v62 = vshrl.u32 %v61, 7
    %v63 = vstv %s60
    %v64 = vadd.s32 %v63, %v62
    %vm65 = vcmp.lt.s32.totalorder %v64, 8
    %v66 = vlaneseq
    %v67 = vand.u32 %v66, 127
    %68 = vset.pattern.permute.xlu0 0
    %69 = vperm.xlu0 %68, %v58
    %v70 = vpop.permute.xlu0 %69
    %vm71 = vcmp.eq.s32.totalorder %v67, %v70
    %v72 = vsel %vm65, 1, 0
    %vm73 = vcmp.eq.s32.totalorder %v72, 1
    %vm74 = vmand %vm71, %vm73
    %v75 = vsel %vm74, 1, 0
    %v76 = vcvt.s32.f32 %v75
    %v77 = vld [vmem:[%s2] sm:$0xff]
    %v78 = vld [vmem:[%s2 + $0x8] sm:$0xff]
    %v79 = vld [vmem:[%s2 + $0x10] sm:$0xff]
    %v80 = vld [vmem:[%s2 + $0x18] sm:$0xff]
    %v81 = vld [vmem:[%s2 + $0x20] sm:$0xff]
    %v82 = vld [vmem:[%s2 + $0x28] sm:$0xff]
    %v83 = vld [vmem:[%s2 + $0x30] sm:$0xff]
    %v84 = vld [vmem:[%s2 + $0x38] sm:$0xff]
    %v85 = vld [vmem:[%s2 + $0x40] sm:$0xff]
    %v86 = vld [vmem:[%s2 + $0x48] sm:$0xff]
    %v87 = vld [vmem:[%s2 + $0x50] sm:$0xff]
    %v88 = vld [vmem:[%s2 + $0x58] sm:$0xff]
    %v89 = vld [vmem:[%s2 + $0x60] sm:$0xff]
    %v90 = vld [vmem:[%s2 + $0x68] sm:$0xff]
    %v91 = vld [vmem:[%s2 + $0x70] sm:$0xff]
    %v92 = vld [vmem:[%s2 + $0x78] sm:$0xff]
    %93 = vmatprep.subr.mxu0 0.0
    %94 = vmatpush1.msra.mxu0 %v77
    %95 = vmatprep.subr.mxu0 0.0
    %96 = vmatpush1.msra.mxu0 %v78
    %97 = vmatprep.subr.mxu0 0.0
    %98 = vmatpush1.msra.mxu0 %v79
    %99 = vmatprep.subr.mxu0 0.0
    %100 = vmatpush1.msra.mxu0 %v80
    %101 = vmatprep.subr.mxu0 0.0
    %102 = vmatpush1.msra.mxu0 %v81
    %103 = vmatprep.subr.mxu0 0.0
    %104 = vmatpush1.msra.mxu0 %v82
    %105 = vmatprep.subr.mxu0 0.0
    %106 = vmatpush1.msra.mxu0 %v83
    %107 = vmatprep.subr.mxu0 0.0
    %108 = vmatpush1.msra.mxu0 %v84
    %109 = vmatprep.subr.mxu0 0.0
    %110 = vmatpush1.msra.mxu0 %v85
    %111 = vmatprep.subr.mxu0 0.0
    %112 = vmatpush1.msra.mxu0 %v86
    %113 = vmatprep.subr.mxu0 0.0
    %114 = vmatpush1.msra.mxu0 %v87
    %115 = vmatprep.subr.mxu0 0.0
    %116 = vmatpush1.msra.mxu0 %v88
    %117 = vmatprep.subr.mxu0 0.0
    %118 = vmatpush1.msra.mxu0 %v89
    %119 = vmatprep.subr.mxu0 0.0
    %120 = vmatpush1.msra.mxu0 %v90
    %121 = vmatprep.subr.mxu0 0.0
    %122 = vmatpush1.msra.mxu0 %v91
    %123 = vmatprep.subr.mxu0 0.0
    %124 = vmatpush1.msra.mxu0 %v92
    %125 = vmatprep.subr.mxu0 0.0
    %126 = vmatpush1.msra.mxu0 0.0
    %127 = vmatprep.subr.mxu0 0.0
    %128 = vmatpush1.msra.mxu0 0.0
    %129 = vmatprep.subr.mxu0 0.0
    %130 = vmatpush1.msra.mxu0 0.0
    %131 = vmatprep.subr.mxu0 0.0
    %132 = vmatpush1.msra.mxu0 0.0
    %133 = vmatprep.subr.mxu0 0.0
    %134 = vmatpush1.msra.mxu0 0.0
    %135 = vmatprep.subr.mxu0 0.0
    %136 = vmatpush1.msra.mxu0 0.0
    %137 = vmatprep.subr.mxu0 0.0
    %138 = vmatpush1.msra.mxu0 0.0
    %139 = vmatprep.subr.mxu0 0.0
    %140 = vmatpush1.msra.mxu0 0.0
    %141 = vmatprep.subr.mxu0 0.0
    %142 = vmatpush1.msra.mxu0 0.0
    %143 = vmatprep.subr.mxu0 0.0
    %144 = vmatpush1.msra.mxu0 0.0
    %145 = vmatprep.subr.mxu0 0.0
    %146 = vmatpush1.msra.mxu0 0.0
    %147 = vmatprep.subr.mxu0 0.0
    %148 = vmatpush1.msra.mxu0 0.0
    %149 = vmatprep.subr.mxu0 0.0
    %150 = vmatpush1.msra.mxu0 0.0
    %151 = vmatprep.subr.mxu0 0.0
    %152 = vmatpush1.msra.mxu0 0.0
    %153 = vmatprep.subr.mxu0 0.0
    %154 = vmatpush1.msra.mxu0 0.0
    %155 = vmatprep.subr.mxu0 0.0
    %156 = vmatpush1.msra.mxu0 0.0
    %157 = vmatprep.mubr.f32.mxu0 0.0
    %158 = vmatmul.mubr.f32.gmra.mrb[0].mxu0 %v76
    %v159 = vpop.f32.mrb[0].mxu0
    %v160 = vadd.f32 0.0, %v159
    %v161 = vpop.f32.mrb[0].mxu0
    %162 = vdwg.mxu0
    %v163 = vld [vmem:[%s44] sm:$0xff]
    %v164 = vsub.f32 %v163, %v160
    %v165 = vmul.f32 %v164, %v164
    %vm166 = vcmask 261120
    %v167 = vsel %vm166, %v165, 0.0
    %168 = vadd.xlane.f32.xlu0 %v167
    %v169 = vpop.xlane.xlu0 %168
    %v170 = vsel %vm65, %v169, 0.0
    %v171 = vrsqrt.pop %v170
    %v172 = vmul.f32 %v170, %v171
    %vm173 = vcmp.eq.f32.partialorder %v170, inf
    %v174 = vsel %vm173, %v170, %v172
    %vm175 = vcmp.eq.f32.partialorder %v170, 0.0
    %v176 = vand.u32 %v170, 2147483648
    %v177 = vsel %vm175, %v176, %v174
    %v178 = vmul.f32 %v76, %v177
    %v179 = vrot.slane %v178, 4
    %v180 = vadd.f32 %v178, %v179
    %v181 = vrot.slane %v180, 2
    %v182 = vadd.f32 %v180, %v181
    %v183 = vrot.slane %v182, 1
    %v184 = vadd.f32 %v182, %v183
    %v185 = vrot.slane %v76, 4
    %v186 = vadd.f32 %v76, %v185
    %v187 = vrot.slane %v186, 2
    %v188 = vadd.f32 %v186, %v187
    %v189 = vrot.slane %v188, 1
    %v190 = vadd.f32 %v188, %v189
    %v191 = vld [vmem:[#allocation2] sm:$0x1]
    %v192 = vadd.f32 %v191, %v184
    %193 = vst [vmem:[#allocation2] sm:$0x1] %v192
    %v194 = vld [vmem:[#allocation4] sm:$0x1]
    %v195 = vadd.f32 %v194, %v190
    %196 = vst [vmem:[#allocation4] sm:$0x1] %v195
    // Predicated region
    $region18: #{tpu_custom_call.1} parent=1 // pred_check
      _
    $region19: #{tpu_custom_call.1} parent=1 // pred_check_branch
      %198 = sbr.rel (0) target = $region21
    $region20: #{tpu_custom_call.1} parent=1 // pred_region
      %s200 = ssub.s32 16, 16
      %201 = vsyncadd [#allocation3], %s200
      %s203 = sshll.u32 [#allocation2], 4
      %s204 = int_to_ptr.vmem [resolvable:$true] %s203
      %206 = dma.vmem_to_hbm [thread:$0]  %s204, 16, %s3, [#allocation3]
    $region21: #{tpu_custom_call.1} parent=1 // pred_fallthru
      _
    // Predicated region
    $region22: #{tpu_custom_call.1} parent=1 // pred_check
      _
    $region23: #{tpu_custom_call.1} parent=1 // pred_check_branch
      %208 = sbr.rel (0) target = $region25
    $region24: #{tpu_custom_call.1} parent=1 // pred_region
      %s210 = ssub.s32 16, 16
      %211 = vsyncadd [#allocation5], %s210
      %s213 = sshll.u32 [#allocation4], 4
      %s214 = int_to_ptr.vmem [resolvable:$true] %s213
      %216 = dma.vmem_to_hbm [thread:$0]  %s214, 16, %s4, [#allocation5]
    $region25: #{tpu_custom_call.1} parent=1 // pred_fallthru
      _
    // Predicated region
    $region26: #{tpu_custom_call.1} parent=1 // pred_check
      _
    $region27: #{tpu_custom_call.1} parent=1 // pred_check_branch
      %218 = sbr.rel (0) target = $region29
    $region28: #{tpu_custom_call.1} parent=1 // pred_region
      %219 = dma.done [#allocation3], 16
    $region29: #{tpu_custom_call.1} parent=1 // pred_fallthru
      _
    // Predicated region
    $region30: #{tpu_custom_call.1} parent=1 // pred_check
      _
    $region31: #{tpu_custom_call.1} parent=1 // pred_check_branch
      %221 = sbr.rel (0) target = $region33
    $region32: #{tpu_custom_call.1} parent=1 // pred_region
      %222 = dma.done [#allocation5], 16
    $region33: #{tpu_custom_call.1} parent=1 // pred_fallthru
      _
    %223 = vsyncpa [#allocation3], 1
    %224 = vsyncpa [#allocation5], 1

</llo_original>
